<compile_context>
chip_gen: v5e
topology: v5e:2x2
jax: 0.10.0
libtpu: 0.0.40
codegen_flags: <defaults>
</compile_context>

<pallas_src>
import functools
import math

import jax
import jax.numpy as jnp
from jax import lax
from jax.experimental import pallas as pl
from jax.experimental.pallas import tpu as pltpu


# -----------------------------------------------------------------------------
# Helpers
# -----------------------------------------------------------------------------
def _pick_tile(dim, pref, align):
    """Largest divisor of `dim` <= pref (prefer multiples of `align`)."""
    if dim <= pref:
        return dim
    for cand in range(pref, 0, -1):
        if dim % cand == 0 and cand % align == 0:
            return cand
    for cand in range(pref, 0, -1):
        if dim % cand == 0:
            return cand
    return dim


def _bytes(dt):
    return jnp.dtype(dt).itemsize


def _mosaic_params(semantics, est_bytes):
    # Explicit scoped-VMEM budget with headroom; clamp so it is safe on v7x
    # (64 MiB physical) while never starving the tiny test shapes.
    limit = int(min(max(3 * est_bytes, 16 * 1024 * 1024), 64 * 1024 * 1024))
    return pltpu.CompilerParams(dimension_semantics=semantics,
                                vmem_limit_bytes=limit)


def _to_mxu(x):
    # MXU inputs are bf16; inputs already stored bf16 in HBM skip the cast.
    return x if x.dtype == jnp.bfloat16 else x.astype(jnp.bfloat16)


# -----------------------------------------------------------------------------
# Tiled linear (+ optional fused GELU):  out = act(x @ w + b)
#   grid = (M/tm, N/tn, K/tk), bf16 MXU inputs, f32 VMEM accumulator.
# -----------------------------------------------------------------------------
def _linear_kernel(x_ref, w_ref, b_ref, o_ref, acc_ref, *, activation):
    @pl.when(pl.program_id(2) == 0)
    def _():
        acc_ref[...] = jnp.zeros_like(acc_ref)

    acc_ref[...] += jnp.dot(_to_mxu(x_ref[...]), _to_mxu(w_ref[...]),
                            preferred_element_type=jnp.float32)

    @pl.when(pl.program_id(2) == pl.num_programs(2) - 1)
    def _():
        y = acc_ref[...] + b_ref[...]
        if activation == "gelu":
            # TODO(synk): reference BERT uses exact erf-GELU; tanh approximation used here.
            y = jax.nn.gelu(y, approximate=True)
        o_ref[...] = y.astype(o_ref.dtype)


def linear(x, w, b, activation=None, out_dtype=jnp.bfloat16):
    M, K = x.shape
    N = w.shape[1]
    sub = 16 if x.dtype == jnp.bfloat16 else 8
    tm = _pick_tile(M, 512, sub)
    tn = _pick_tile(N, 512, 128)
    tk = _pick_tile(K, 512, 128)
    est = (2 * (tm * tk * _bytes(x.dtype) + tk * tn * _bytes(w.dtype)
                + tn * 4 + tm * tn * _bytes(out_dtype))
           + tm * tn * 4)
    return pl.pallas_call(
        functools.partial(_linear_kernel, activation=activation),
        out_shape=jax.ShapeDtypeStruct((M, N), out_dtype),
        grid=(M // tm, N // tn, K // tk),
        in_specs=[
            pl.BlockSpec((tm, tk), lambda i, j, k: (i, k)),
            pl.BlockSpec((tk, tn), lambda i, j, k: (k, j)),
            pl.BlockSpec((1, tn), lambda i, j, k: (0, j)),
        ],
        out_specs=pl.BlockSpec((tm, tn), lambda i, j, k: (i, j)),
        scratch_shapes=[pltpu.VMEM((tm, tn), jnp.float32)],
        compiler_params=_mosaic_params(("parallel", "parallel", "arbitrary"), est),
    )(x, w, b.reshape(1, N).astype(jnp.float32))


# -----------------------------------------------------------------------------
# Fused QKV projection: x(M,K) @ wqkv(3,K,H) + bqkv(3,H) -> (3, M, H)
#   The (3,·,·) weight layout keeps every block lane-aligned and lets attention
#   address q/k/v via BlockSpec index maps (no wrapper slicing / HBM round trip).
# -----------------------------------------------------------------------------
def _qkv_kernel(x_ref, w_ref, b_ref, o_ref, acc_ref):
    @pl.when(pl.program_id(3) == 0)
    def _():
        acc_ref[...] = jnp.zeros_like(acc_ref)

    acc_ref[...] += jnp.dot(_to_mxu(x_ref[...]), _to_mxu(w_ref[0]),
                            preferred_element_type=jnp.float32)

    @pl.when(pl.program_id(3) == pl.num_programs(3) - 1)
    def _():
        o_ref[0] = (acc_ref[...] + b_ref[0]).astype(o_ref.dtype)


def qkv_linear(x, wqkv, bqkv, out_dtype=jnp.bfloat16):
    M, K = x.shape
    H = wqkv.shape[2]
    sub = 16 if x.dtype == jnp.bfloat16 else 8
    tm = _pick_tile(M, 512, sub)
    tn = _pick_tile(H, 512, 128)
    tk = _pick_tile(K, 512, 128)
    est = (2 * (tm * tk * _bytes(x.dtype) + tk * tn * _bytes(wqkv.dtype)
                + tn * 4 + tm * tn * _bytes(out_dtype))
           + tm * tn * 4)
    return pl.pallas_call(
        _qkv_kernel,
        out_shape=jax.ShapeDtypeStruct((3, M, H), out_dtype),
        grid=(M // tm, 3, H // tn, K // tk),
        in_specs=[
            pl.BlockSpec((tm, tk), lambda i, g, j, k: (i, k)),
            pl.BlockSpec((1, tk, tn), lambda i, g, j, k: (g, k, j)),
            pl.BlockSpec((1, 1, tn), lambda i, g, j, k: (g, 0, j)),
        ],
        out_specs=pl.BlockSpec((1, tm, tn), lambda i, g, j, k: (g, i, j)),
        scratch_shapes=[pltpu.VMEM((tm, tn), jnp.float32)],
        compiler_params=_mosaic_params(
            ("parallel", "parallel", "parallel", "arbitrary"), est),
    )(x, wqkv, bqkv.reshape(3, 1, H).astype(jnp.float32))


# -----------------------------------------------------------------------------
# Fused: out = LayerNorm(residual + x @ w + b)   (epilogue fused into matmul)
#   grid = (M/tm, K/tk); N kept whole so LN can reduce the full row in-VMEM.
# -----------------------------------------------------------------------------
def _linear_add_ln_kernel(x_ref, w_ref, b_ref, r_ref, g_ref, be_ref,
                          o_ref, acc_ref, *, eps):
    @pl.when(pl.program_id(1) == 0)
    def _():
        acc_ref[...] = jnp.zeros_like(acc_ref)

    acc_ref[...] += jnp.dot(_to_mxu(x_ref[...]), _to_mxu(w_ref[...]),
                            preferred_element_type=jnp.float32)

    @pl.when(pl.program_id(1) == pl.num_programs(1) - 1)
    def _():
        z = acc_ref[...] + b_ref[...] + r_ref[...].astype(jnp.float32)
        mu = jnp.mean(z, axis=-1, keepdims=True)
        var = jnp.mean((z - mu) ** 2, axis=-1, keepdims=True)
        norm = (z - mu) * lax.rsqrt(var + eps)
        o_ref[...] = (norm * g_ref[...] + be_ref[...]).astype(o_ref.dtype)


def linear_residual_layernorm(x, w, b, residual, gamma, beta,
                              eps=1e-12, out_dtype=jnp.bfloat16):
    M, K = x.shape
    N = w.shape[1]
    sub = 16 if x.dtype == jnp.bfloat16 else 8
    tm = _pick_tile(M, 512, sub)
    tk = _pick_tile(K, 512, 128)
    est = (2 * (tm * tk * _bytes(x.dtype) + tk * N * _bytes(w.dtype)
                + tm * N * _bytes(residual.dtype) + 3 * N * 4
                + tm * N * _bytes(out_dtype))
           + tm * N * 4)
    return pl.pallas_call(
        functools.partial(_linear_add_ln_kernel, eps=eps),
        out_shape=jax.ShapeDtypeStruct((M, N), out_dtype),
        grid=(M // tm, K // tk),
        in_specs=[
            pl.BlockSpec((tm, tk), lambda i, k: (i, k)),
            pl.BlockSpec((tk, N), lambda i, k: (k, 0)),
            pl.BlockSpec((1, N), lambda i, k: (0, 0)),
            pl.BlockSpec((tm, N), lambda i, k: (i, 0)),
            pl.BlockSpec((1, N), lambda i, k: (0, 0)),
            pl.BlockSpec((1, N), lambda i, k: (0, 0)),
        ],
        out_specs=pl.BlockSpec((tm, N), lambda i, k: (i, 0)),
        scratch_shapes=[pltpu.VMEM((tm, N), jnp.float32)],
        compiler_params=_mosaic_params(("parallel", "arbitrary"), est),
    )(x, w, b.reshape(1, N).astype(jnp.float32), residual,
      gamma.reshape(1, N).astype(jnp.float32),
      beta.reshape(1, N).astype(jnp.float32))


# -----------------------------------------------------------------------------
# Fused embedding adds (pos + type) + LayerNorm.  Avoids writing the pre-LN
# (B*L, H) f32 intermediate to HBM.
# -----------------------------------------------------------------------------
def _embed_ln_kernel(tok_ref, pos_ref, typ_ref, g_ref, b_ref, o_ref, *, eps):
    z = tok_ref[0] + pos_ref[...] + typ_ref[...]
    mu = jnp.mean(z, axis=-1, keepdims=True)
    var = jnp.mean((z - mu) ** 2, axis=-1, keepdims=True)
    norm = (z - mu) * lax.rsqrt(var + eps)
    o_ref[0] = (norm * g_ref[...] + b_ref[...]).astype(o_ref.dtype)


def embed_layernorm(tok, pos, typ_row, gamma, beta, eps=1e-12,
                    out_dtype=jnp.bfloat16):
    B, L, H = tok.shape
    tl = _pick_tile(L, 256, 8)
    est = 2 * (2 * tl * H * 4 + 3 * H * 4 + tl * H * _bytes(out_dtype))
    return pl.pallas_call(
        functools.partial(_embed_ln_kernel, eps=eps),
        out_shape=jax.ShapeDtypeStruct((B, L, H), out_dtype),
        grid=(B, L // tl),
        in_specs=[
            pl.BlockSpec((1, tl, H), lambda b, li: (b, li, 0)),
            pl.BlockSpec((tl, H), lambda b, li: (li, 0)),
            pl.BlockSpec((1, H), lambda b, li: (0, 0)),
            pl.BlockSpec((1, H), lambda b, li: (0, 0)),
            pl.BlockSpec((1, H), lambda b, li: (0, 0)),
        ],
        out_specs=pl.BlockSpec((1, tl, H), lambda b, li: (b, li, 0)),
        compiler_params=_mosaic_params(("parallel", "parallel"), est),
    )(tok, pos, typ_row.reshape(1, H), gamma.reshape(1, H), beta.reshape(1, H))


# -----------------------------------------------------------------------------
# Fused attention over a query tile.  Q/K/V come straight from the fused
# (3, B, L, H) QKV tensor via BlockSpecs; heads split inside the kernel with
# direct per-head stores (no concat).  Softmax in f32, MXU in bf16.
# -----------------------------------------------------------------------------
def _attn_kernel(q_ref, k_ref, v_ref, m_ref, o_ref, *, scale, num_heads):
    q = q_ref[0, 0]                 # (tq, H) bf16
    k = k_ref[0, 0]                 # (L, H)  bf16
    v = v_ref[0, 0]                 # (L, H)  bf16
    bias = m_ref[0]                 # (1, L)  additive mask, f32
    tq, H = q.shape
    dH = H // num_heads

    # Fold 1/sqrt(dH) into Q once: O(tq*H) multiplies instead of O(tq*L)/head.
    qs = (q.astype(jnp.float32) * scale).astype(jnp.bfloat16)

    # TODO(synk): for dH=64 configs, process heads in lane-aligned pairs (128
    # lanes) to avoid masked sub-lane-width stores on v6e/v7x.
    for h in range(num_heads):      # static, small head count
        sl = slice(h * dH, (h + 1) * dH)
        s = lax.dot_general(qs[:, sl], k[:, sl], (((1,), (1,)), ((), ())),
                            preferred_element_type=jnp.float32)
        s = s + bias
        m = jnp.max(s, axis=-1, keepdims=True)
        p = jnp.exp(s - m)
        denom = jnp.sum(p, axis=-1, keepdims=True)
        p = p * pl.reciprocal(denom, approx=True)     # EUP slot (nearly free)
        ctx = jnp.dot(p.astype(jnp.bfloat16), v[:, sl],
                      preferred_element_type=jnp.float32)
        o_ref[0, :, sl] = ctx.astype(o_ref.dtype)     # direct per-head store


def attention(qkv, bias, scale, num_heads, out_dtype=jnp.bfloat16):
    """qkv: (3, B, L, H); bias: (B, 1, L) additive mask."""
    _, B, L, H = qkv.shape
    tq = _pick_tile(L, 256, 16 if qkv.dtype == jnp.bfloat16 else 8)
    elt = _bytes(qkv.dtype)
    est = 2 * ((tq * H + 2 * L * H) * elt + L * 4 + tq * H * _bytes(out_dtype))
    return pl.pallas_call(
        functools.partial(_attn_kernel, scale=scale, num_heads=num_heads),
        out_shape=jax.ShapeDtypeStruct((B, L, H), out_dtype),
        grid=(B, L // tq),
        in_specs=[
            pl.BlockSpec((1, 1, tq, H), lambda b, qi: (0, b, qi, 0)),   # Q tile
            pl.BlockSpec((1, 1, L, H), lambda b, qi: (1, b, 0, 0)),     # K
            pl.BlockSpec((1, 1, L, H), lambda b, qi: (2, b, 0, 0)),     # V
            pl.BlockSpec((1, 1, L), lambda b, qi: (b, 0, 0)),
        ],
        out_specs=pl.BlockSpec((1, tq, H), lambda b, qi: (b, qi, 0)),
        compiler_params=_mosaic_params(("parallel", "parallel"), est),
    )(qkv, qkv, qkv, bias)


# -----------------------------------------------------------------------------
# Fused span pooling + CosineEmbeddingLoss.
#   grid = (P,), scalar-prefetched spans drive a per-phrase (1, L, H) DMA of
#   only the needed sentence; pairs are sorted by sentence so consecutive grid
#   steps reuse the resident sentence block.  Loss accumulates across the grid.
# -----------------------------------------------------------------------------
def _pool_loss_kernel(sidx_ref, ss_ref, se_ref, ts_ref, te_ref, lb_ref,
                      sent_ref, loss_ref, *, margin, pooling, num_pairs):
    p = pl.program_id(0)

    @pl.when(p == 0)
    def _():
        loss_ref[...] = jnp.zeros_like(loss_ref)

    x = sent_ref[0]                                   # (L, H) f32
    pos = lax.broadcasted_iota(jnp.int32, x.shape, 0)

    def pool(start, end):
        mask = (pos >= start) & (pos < end)
        if pooling == "max":
            # TODO(synk): empty span under max pooling yields -inf (reference would error).
            return jnp.max(jnp.where(mask, x, -jnp.inf), axis=0, keepdims=True)
        cnt = jnp.maximum(end - start, 1).astype(jnp.float32)
        return jnp.sum(jnp.where(mask, x, 0.0), axis=0, keepdims=True) / cnt

    s_emb = pool(ss_ref[p], se_ref[p])                # (1, H)
    t_emb = pool(ts_ref[p], te_ref[p])                # (1, H)

    eps = 1e-8
    dot = jnp.sum(s_emb * t_emb)
    ns = jnp.sqrt(jnp.sum(s_emb * s_emb))
    nt = jnp.sqrt(jnp.sum(t_emb * t_emb))
    cos = dot / jnp.maximum(ns * nt, eps)
    lbl = lb_ref[p]
    per = jnp.where(lbl > 0, 1.0 - cos, jnp.maximum(cos - margin, 0.0))
    loss_ref[...] += per * (1.0 / float(num_pairs))   # mean reduction


def span_pool_cosine_loss(sent_emb, sidx, s_start, s_end, t_start, t_end,
                          labels, *, margin, pooling):
    B, L, H = sent_emb.shape
    P = sidx.shape[0]
    # Sort phrase pairs by sentence index so consecutive grid steps map to the
    # same sentence block index and Pallas skips the (L*H*4)-byte re-DMA.
    order = jnp.argsort(sidx)
    sidx, s_start, s_end, t_start, t_end, labels = (
        jnp.take(sidx, order), jnp.take(s_start, order), jnp.take(s_end, order),
        jnp.take(t_start, order), jnp.take(t_end, order), jnp.take(labels, order))
    est = 2 * L * H * 4 + 1024
    out = pl.pallas_call(
        functools.partial(_pool_loss_kernel, margin=margin,
                          pooling=pooling, num_pairs=P),
        out_shape=jax.ShapeDtypeStruct((1, 1), jnp.float32),
        grid_spec=pltpu.PrefetchScalarGridSpec(
            num_scalar_prefetch=6,
            grid=(P,),
            in_specs=[pl.BlockSpec(
                (1, L, H),
                lambda p, sidx, ss, se, ts, te, lb: (sidx[p], 0, 0))],
            out_specs=pl.BlockSpec(
                (1, 1), lambda p, sidx, ss, se, ts, te, lb: (0, 0)),
        ),
        compiler_params=_mosaic_params(("arbitrary",), est),
    )(sidx, s_start, s_end, t_start, t_end, labels, sent_emb)
    return out[0, 0]


# -----------------------------------------------------------------------------
# Mini-BERT parameters & forward (glue in JAX, hot paths in Pallas)
# -----------------------------------------------------------------------------
def init_params(key, *, vocab, max_pos, hidden, ffn, num_layers, std=0.02):
    keys = jax.random.split(key, 3 + num_layers * 4)
    p = {
        "tok_emb": jax.random.normal(keys[0], (vocab, hidden), jnp.float32) * std,
        "pos_emb": jax.random.normal(keys[1], (max_pos, hidden), jnp.float32) * std,
        "typ_emb": jax.random.normal(keys[2], (2, hidden), jnp.float32) * std,
        "emb_ln_g": jnp.ones((hidden,), jnp.float32),
        "emb_ln_b": jnp.zeros((hidden,), jnp.float32),
        "layers": [],
    }
    ki = 3
    for _ in range(num_layers):
        layer = {
            # Fused QKV projection stored as (3, H, H) bf16 (q/k/v stacked).
            "wqkv": (jax.random.normal(keys[ki + 0], (3, hidden, hidden),
                                       jnp.float32) * std).astype(jnp.bfloat16),
            "wo": (jax.random.normal(keys[ki + 1], (hidden, hidden),
                                     jnp.float32) * std).astype(jnp.bfloat16),
            "w1": (jax.random.normal(keys[ki + 2], (hidden, ffn),
                                     jnp.float32) * std).astype(jnp.bfloat16),
            "w2": (jax.random.normal(keys[ki + 3], (ffn, hidden),
                                     jnp.float32) * std).astype(jnp.bfloat16),
            "bqkv": jnp.zeros((3, hidden), jnp.float32),
            "bo": jnp.zeros((hidden,), jnp.float32),
            "b1": jnp.zeros((ffn,), jnp.float32),
            "b2": jnp.zeros((hidden,), jnp.float32),
            "ln1_g": jnp.ones((hidden,), jnp.float32),
            "ln1_b": jnp.zeros((hidden,), jnp.float32),
            "ln2_g": jnp.ones((hidden,), jnp.float32),
            "ln2_b": jnp.zeros((hidden,), jnp.float32),
        }
        p["layers"].append(layer)
        ki += 4
    return p


def bert_forward(params, input_ids, input_mask, *, num_heads):
    B, L = input_ids.shape
    H = params["tok_emb"].shape[1]
    dH = H // num_heads

    # Embedding gather is XLA glue; pos/typ adds + LayerNorm fused in one kernel.
    tok = jnp.take(params["tok_emb"], input_ids, axis=0)           # (B, L, H) f32
    x2 = embed_layernorm(tok, params["pos_emb"][:L], params["typ_emb"][0],
                         params["emb_ln_g"], params["emb_ln_b"])   # (B, L, H) bf16
    x2 = x2.reshape(B * L, H)

    attn_bias = ((1.0 - input_mask.astype(jnp.float32)) * -1e9).reshape(B, 1, L)
    scale = 1.0 / math.sqrt(dH)

    n_layers = len(params["layers"])
    for li, layer in enumerate(params["layers"]):
        h = x2                                                 # (B*L, H) bf16
        qkv = qkv_linear(h, layer["wqkv"], layer["bqkv"])      # (3, B*L, H) bf16
        qkv = qkv.reshape(3, B, L, H)                          # free reshape
        ctx = attention(qkv, attn_bias, scale, num_heads)      # (B, L, H) bf16
        ctx = ctx.reshape(B * L, H)
        # Attention output projection fused with residual + LayerNorm.
        h1 = linear_residual_layernorm(ctx, layer["wo"], layer["bo"], h,
                                       layer["ln1_g"], layer["ln1_b"])
        ff = linear(h1, layer["w1"], layer["b1"], activation="gelu")
        # Second FFN matmul fused with residual + LayerNorm.  Only the final
        # layer (the sentence embedding fed to the loss) is emitted in f32.
        out_dtype = jnp.float32 if li == n_layers - 1 else jnp.bfloat16
        x2 = linear_residual_layernorm(ff, layer["w2"], layer["b2"], h1,
                                       layer["ln2_g"], layer["ln2_b"],
                                       out_dtype=out_dtype)

    # TODO(synk): nn.Dropout is identity at inference; stochastic dropout not applied.
    return x2.reshape(B, L, H)


def bert_trainer_forward(params, input_ids, input_mask,
                         sidx, s_start, s_end, t_start, t_end, labels,
                         *, num_heads, margin, pooling):
    # TODO(synk): only the CosineEmbeddingLoss branch is implemented (not TripletMarginLoss).
    sent_emb = bert_forward(params, input_ids, input_mask, num_heads=num_heads)
    return span_pool_cosine_loss(sent_emb, sidx, s_start, s_end, t_start, t_end,
                                 labels, margin=margin, pooling=pooling)


# -----------------------------------------------------------------------------
if __name__ == "__main__":
    # Small config consistent with the module: CosineEmbeddingLoss + mean pooling.
    B, L, H = 2, 8, 32
    NUM_HEADS, FFN, LAYERS, VOCAB = 2, 64, 2, 100
    MARGIN, POOLING = 0.4, "mean"

    key = jax.random.PRNGKey(0)
    k_param, k_ids = jax.random.split(key)
    params = init_params(k_param, vocab=VOCAB, max_pos=L, hidden=H,
                         ffn=FFN, num_layers=LAYERS)

    input_ids = jax.random.randint(k_ids, (B, L), 0, VOCAB, dtype=jnp.int32)
    input_mask = jnp.ones((B, L), dtype=jnp.int32)

    # Two phrase pairs per sentence -> 4 pairs total.
    s_span_set = [[(1, 3), (4, 6)], [(0, 2), (3, 7)]]
    t_span_set = [[(2, 5), (1, 4)], [(2, 6), (0, 3)]]
    label_set = [[1, -1], [1, -1]]

    sidx, s_start, s_end, t_start, t_end, labels = [], [], [], [], [], []
    for si in range(B):
        for (ss, se), (ts, te), lb in zip(s_span_set[si], t_span_set[si], label_set[si]):
            sidx.append(si)
            s_start.append(ss); s_end.append(se)
            t_start.append(ts); t_end.append(te)
            labels.append(lb)
    sidx = jnp.array(sidx, jnp.int32)
    s_start = jnp.array(s_start, jnp.int32)
    s_end = jnp.array(s_end, jnp.int32)
    t_start = jnp.array(t_start, jnp.int32)
    t_end = jnp.array(t_end, jnp.int32)
    labels = jnp.array(labels, jnp.int32)   # +1 / -1, read from SMEM in the kernel

    loss = bert_trainer_forward(
        params, input_ids, input_mask,
        sidx, s_start, s_end, t_start, t_end, labels,
        num_heads=NUM_HEADS, margin=MARGIN, pooling=POOLING)
    loss = jax.block_until_ready(loss)
    assert loss.shape == () and jnp.isfinite(loss)
    print("KERNEL_OK")
</pallas_src>

<mosaic_0001>
module attributes {stable_mosaic.version = 11 : i64} {
  func.func @_embed_ln_kernel(%arg0: i32, %arg1: i32, %arg2: memref<1x8x32xf32, #tpu.memory_space<vmem>>, %arg3: memref<8x32xf32, #tpu.memory_space<vmem>>, %arg4: memref<1x32xf32, #tpu.memory_space<vmem>>, %arg5: memref<1x32xf32, #tpu.memory_space<vmem>>, %arg6: memref<1x32xf32, #tpu.memory_space<vmem>>, %arg7: memref<1x8x32xbf16, #tpu.memory_space<vmem>>) attributes {dimension_semantics = [#tpu.dimension_semantics<parallel>, #tpu.dimension_semantics<parallel>], iteration_bounds = array<i64: 2, 1>, scalar_prefetch = 0 : i64, scratch_operands = 0 : i64, tpu.core_type = #tpu.core_type<tc>, window_params = [{transform_indices = @transform_0, window_bounds = array<i64: 1, 8, 32>}, {transform_indices = @transform_1, window_bounds = array<i64: 8, 32>}, {pipeline_mode = #tpu.pipeline_mode<synchronous>, transform_indices = @transform_2, window_bounds = array<i64: 1, 32>}, {pipeline_mode = #tpu.pipeline_mode<synchronous>, transform_indices = @transform_3, window_bounds = array<i64: 1, 32>}, {pipeline_mode = #tpu.pipeline_mode<synchronous>, transform_indices = @transform_4, window_bounds = array<i64: 1, 32>}, {transform_indices = @transform_5, window_bounds = array<i64: 1, 8, 32>}]} {
    %c0 = arith.constant 0 : index
    %c0_0 = arith.constant 0 : index
    %c0_1 = arith.constant 0 : index
    %0 = vector.load %arg2[%c0, %c0_0, %c0_1] : memref<1x8x32xf32, #tpu.memory_space<vmem>>, vector<1x8x32xf32>
    %1 = vector.shape_cast %0 : vector<1x8x32xf32> to vector<8x32xf32>
    %c0_2 = arith.constant 0 : index
    %c0_3 = arith.constant 0 : index
    %2 = vector.load %arg3[%c0_2, %c0_3] : memref<8x32xf32, #tpu.memory_space<vmem>>, vector<8x32xf32>
    %3 = arith.addf %1, %2 : vector<8x32xf32>
    %c0_4 = arith.constant 0 : index
    %c0_5 = arith.constant 0 : index
    %4 = vector.load %arg4[%c0_4, %c0_5] : memref<1x32xf32, #tpu.memory_space<vmem>>, vector<1x32xf32>
    %5 = vector.broadcast %4 : vector<1x32xf32> to vector<8x32xf32>
    %6 = arith.addf %3, %5 : vector<8x32xf32>
    %cst = arith.constant dense<0.000000e+00> : vector<8xf32>
    %7 = vector.multi_reduction <add>, %6, %cst [1] : vector<8x32xf32> to vector<8xf32>
    %8 = vector.shape_cast %7 : vector<8xf32> to vector<8x1xf32>
    %cst_6 = arith.constant 3.200000e+01 : f32
    %9 = vector.broadcast %cst_6 : f32 to vector<8x1xf32>
    %10 = arith.divf %8, %9 : vector<8x1xf32>
    %11 = vector.broadcast %10 : vector<8x1xf32> to vector<8x32xf32>
    %12 = arith.subf %6, %11 : vector<8x32xf32>
    %13 = arith.mulf %12, %12 : vector<8x32xf32>
    %cst_7 = arith.constant dense<0.000000e+00> : vector<8xf32>
    %14 = vector.multi_reduction <add>, %13, %cst_7 [1] : vector<8x32xf32> to vector<8xf32>
    %15 = vector.shape_cast %14 : vector<8xf32> to vector<8x1xf32>
    %cst_8 = arith.constant 3.200000e+01 : f32
    %16 = vector.broadcast %cst_8 : f32 to vector<8x1xf32>
    %17 = arith.divf %15, %16 : vector<8x1xf32>
    %18 = vector.broadcast %10 : vector<8x1xf32> to vector<8x32xf32>
    %19 = arith.subf %6, %18 : vector<8x32xf32>
    %cst_9 = arith.constant 9.99999996E-13 : f32
    %20 = vector.broadcast %cst_9 : f32 to vector<8x1xf32>
    %21 = arith.addf %17, %20 : vector<8x1xf32>
    %22 = math.rsqrt %21 : vector<8x1xf32>
    %23 = vector.broadcast %22 : vector<8x1xf32> to vector<8x32xf32>
    %24 = arith.mulf %19, %23 : vector<8x32xf32>
    %c0_10 = arith.constant 0 : index
    %c0_11 = arith.constant 0 : index
    %25 = vector.load %arg5[%c0_10, %c0_11] : memref<1x32xf32, #tpu.memory_space<vmem>>, vector<1x32xf32>
    %26 = vector.broadcast %25 : vector<1x32xf32> to vector<8x32xf32>
    %27 = arith.mulf %24, %26 : vector<8x32xf32>
    %c0_12 = arith.constant 0 : index
    %c0_13 = arith.constant 0 : index
    %28 = vector.load %arg6[%c0_12, %c0_13] : memref<1x32xf32, #tpu.memory_space<vmem>>, vector<1x32xf32>
    %29 = vector.broadcast %28 : vector<1x32xf32> to vector<8x32xf32>
    %30 = arith.addf %27, %29 : vector<8x32xf32>
    %31 = arith.truncf %30 : vector<8x32xf32> to vector<8x32xbf16>
    %c0_14 = arith.constant 0 : index
    %c0_15 = arith.constant 0 : index
    %c0_16 = arith.constant 0 : index
    %32 = vector.load %arg7[%c0_14, %c0_15, %c0_16] : memref<1x8x32xbf16, #tpu.memory_space<vmem>>, vector<1x8x32xbf16>
    %33 = vector.shape_cast %32 : vector<1x8x32xbf16> to vector<8x32xbf16>
    %34 = vector.shape_cast %31 : vector<8x32xbf16> to vector<1x8x32xbf16>
    tpu.vector_store %arg7[%c0_14, %c0_15, %c0_16], %34 {strides = array<i32>} : memref<1x8x32xbf16, #tpu.memory_space<vmem>>, vector<1x8x32xbf16>,
    return
  }
  func.func @transform_0(%arg0: i32, %arg1: i32) -> (i32, i32, i32) {
    %c0_i32 = arith.constant 0 : i32
    %c0_i32_0 = arith.constant 0 : i32
    return %arg0, %arg1, %c0_i32 : i32, i32, i32
  }
  func.func @transform_1(%arg0: i32, %arg1: i32) -> (i32, i32) {
    %c0_i32 = arith.constant 0 : i32
    %c0_i32_0 = arith.constant 0 : i32
    return %arg1, %c0_i32 : i32, i32
  }
  func.func @transform_2(%arg0: i32, %arg1: i32) -> (i32, i32) {
    %c0_i32 = arith.constant 0 : i32
    %c0_i32_0 = arith.constant 0 : i32
    %c0_i32_1 = arith.constant 0 : i32
    return %c0_i32, %c0_i32_0 : i32, i32
  }
  func.func @transform_3(%arg0: i32, %arg1: i32) -> (i32, i32) {
    %c0_i32 = arith.constant 0 : i32
    %c0_i32_0 = arith.constant 0 : i32
    %c0_i32_1 = arith.constant 0 : i32
    return %c0_i32, %c0_i32_0 : i32, i32
  }
  func.func @transform_4(%arg0: i32, %arg1: i32) -> (i32, i32) {
    %c0_i32 = arith.constant 0 : i32
    %c0_i32_0 = arith.constant 0 : i32
    %c0_i32_1 = arith.constant 0 : i32
    return %c0_i32, %c0_i32_0 : i32, i32
  }
  func.func @transform_5(%arg0: i32, %arg1: i32) -> (i32, i32, i32) {
    %c0_i32 = arith.constant 0 : i32
    %c0_i32_0 = arith.constant 0 : i32
    return %arg0, %arg1, %c0_i32 : i32, i32, i32
  }
}

</mosaic_0001>

<llo_original>
// kernel: tpu_custom_call.1
$region0: #{tpu_custom_call.1}
  #allocation0 [shape = 'u32[]', space=smem, size = 0x4, offset = 0x4, fixed_abs, tag = 'smem constant byte address 0x4 - core index']
  #allocation1 [shape = 'u32[72,128]{1,0:T(1,128)}', space=vmem, size = 0x9000, scoped, tag = 'internal scratch']
  %s0 = inlined_call_operand.hbm [shape: f32[2,8,32], index: 0, kind: input, shape index: {}]
  %s1 = inlined_call_operand.hbm [shape: f32[8,32], index: 1, kind: input, shape index: {}]
  %s2 = inlined_call_operand.vmem [shape: f32[1,32], index: 2, kind: input, shape index: {}]
  %s3 = inlined_call_operand.vmem [shape: f32[1,32], index: 3, kind: input, shape index: {}]
  %s4 = inlined_call_operand.vmem [shape: f32[1,32], index: 4, kind: input, shape index: {}]
  %s5 = inlined_call_operand.hbm [shape: bf16[2,8,32], index: 5, kind: output, shape index: {}]
  %s6 = sld [smem:[#allocation0]]
  $region61: #{tpu_custom_call.1} parent=0
    _
  %s8 = ssub.s32 1, %s6
  %s9 = scalar_select 0, %s8, %s6
  $region1: #{tpu_custom_call.1} parent=0
    #allocation2 [shape = 'u8[8192]{0}', space=vmem, size = 0x2000, scoped, tag = 'input window, operand 0']
    #allocation3 [shape = 's32[2]{0}', space=sflag, size = 0x8, scoped, tag = 'scoped memory for tpu_custom_call.1']
    #allocation4 [shape = 's32[2]{0}', space=sflag, size = 0x8, scoped, tag = 'scoped memory for tpu_custom_call.1']
    #allocation5 [shape = 'u8[4096]{0}', space=vmem, size = 0x1000, scoped, tag = 'input window, operand 1, single buffered']
    #allocation6 [shape = 's32[1]{0}', space=sflag, size = 0x4, scoped, tag = 'scoped memory for tpu_custom_call.1']
    #allocation7 [shape = 'u8[4096]{0}', space=vmem, size = 0x1000, scoped, tag = 'output window, operand 0']
    %10 = vsyncpa [#allocation3], 0
    %s11 = scalar_lea.sflag [#allocation3], 1
    %12 = vsyncpa %s11, 0
    %13 = vsyncpa [#allocation6], 0
    %14 = vsyncpa [#allocation4], 0
    %s15 = scalar_lea.sflag [#allocation4], 1
    %16 = vsyncpa %s15, 0
    loop: start=0, step=1, limit=4
    $region2: #{tpu_custom_call.1} parent=1 // loop_pre_header
      _
    $region3: #{tpu_custom_call.1} parent=1 // loop_header
      %s18 = sphi 0, %s22
      %p19 = scmp.ge.s32.totalorder %s18, 4
      %s25 = sphi 0, %s37
      %s26 = sphi 0, %s33
      %s27 = sphi 0, %s25
      %s28 = sphi 0, %s26
      %s29 = sphi 0, %s27
      %s30 = sphi 0, %s28
      %s42 = sphi 0, %s44
      %s45 = sphi 0, %s42
      %s46 = sphi 0, %s45
      %s62 = sphi 0, %s46
      %s68 = sphi 0, %s70
      %s71 = sphi 0, %s68
      %s72 = sphi 0, %s71
      %s88 = sphi 0, %s72
      %s92 = sphi 0, %s92
      %s94 = sphi 0, %s92
      %s95 = sphi 0, %s94
      %s109 = sphi 0, %s95
      %s113 = sphi 0, %s113
      %s115 = sphi 0, %s113
      %s116 = sphi 0, %s115
      %s130 = sphi 0, %s116
      %s134 = sphi 0, %s134
      %s136 = sphi 0, %s134
      %s137 = sphi 0, %s136
      %s151 = sphi 0, %s137
      %s159 = sphi 0, %s161
      %s162 = sphi 0, %s159
      %s163 = sphi 0, %s162
      %s179 = sphi 0, %s163
    $region4: #{tpu_custom_call.1} parent=1 // loop_header_branch
      %21 = sbr.rel (%p19) target = $region8
    $region5: #{tpu_custom_call.1} parent=1 // loop_body
      %s23 = ssub.s32 %s18, 1
      %s24 = ssub.s32 %s18, 2
      %s31 = sadd.s32 1, %s26
      %p32 = scmp.ge.s32.totalorder %s31, 1
      %s33 = scalar_select %p32, 0, %s31
      %s34 = sadd.s32 1, %s25
      %s35 = scalar_select %p32, %s34, %s25
      %p36 = scmp.ge.s32.totalorder %s35, 2
      %s37 = scalar_select %p36, 0, %s35
      %s38 = ssub.s32 %s25, %s37
      %s39 = ssub.s32 %s26, %s33
      %s40 = sor.u32 %s38, %s39
      %p41 = scmp.eq.s32.totalorder %s40, 0
      %s43 = sadd.s32 %s42, 1
      %s44 = scalar_select %p41, %s42, %s43
      %p47 = pneg %p41
      %p48 = scmp.eq.s32.totalorder %s18, 1
      %p49 = por %p47, %p48
      %p50 = scmp.ne.s32.totalorder %s42, %s45
      %p51 = scmp.eq.s32.totalorder %s18, 0
      %p52 = por %p50, %p51
      %p53 = scmp.ne.s32.totalorder %s42, %s45
      %p54 = scmp.eq.s32.totalorder %s23, 1
      %p55 = por %p53, %p54
      %p56 = scmp.ne.s32.totalorder %s45, %s46
      %p57 = scmp.eq.s32.totalorder %s23, 0
      %p58 = por %p56, %p57
      %p59 = scmp.ne.s32.totalorder %s45, %s46
      %p60 = scmp.eq.s32.totalorder %s24, 1
      %p61 = por %p59, %p60
      %p63 = scmp.ne.s32.totalorder %s46, %s62
      %p64 = scmp.eq.s32.totalorder %s24, 0
      %p65 = por %p63, %p64
      %s66 = ssub.s32 %s26, %s33
      %p67 = scmp.eq.s32.totalorder %s66, 0
      %s69 = sadd.s32 %s68, 1
      %s70 = scalar_select %p67, %s68, %s69
      %p73 = pneg %p67
      %p74 = scmp.eq.s32.totalorder %s18, 1
      %p75 = por %p73, %p74
      %p76 = scmp.ne.s32.totalorder %s68, %s71
      %p77 = scmp.eq.s32.totalorder %s18, 0
      %p78 = por %p76, %p77
      %p79 = scmp.ne.s32.totalorder %s68, %s71
      %p80 = scmp.eq.s32.totalorder %s23, 1
      %p81 = por %p79, %p80
      %p82 = scmp.ne.s32.totalorder %s71, %s72
      %p83 = scmp.eq.s32.totalorder %s23, 0
      %p84 = por %p82, %p83
      %p85 = scmp.ne.s32.totalorder %s71, %s72
      %p86 = scmp.eq.s32.totalorder %s24, 1
      %p87 = por %p85, %p86
      %p89 = scmp.ne.s32.totalorder %s72, %s88
      %p90 = scmp.eq.s32.totalorder %s24, 0
      %p91 = por %p89, %p90
      %s93 = sadd.s32 %s92, 1
      %p96 = scmp.eq.s32.totalorder %s18, 1
      %p97 = scmp.ne.s32.totalorder %s92, %s94
      %p98 = scmp.eq.s32.totalorder %s18, 0
      %p99 = por %p97, %p98
      %p100 = scmp.ne.s32.totalorder %s92, %s94
      %p101 = scmp.eq.s32.totalorder %s23, 1
      %p102 = por %p100, %p101
      %p103 = scmp.ne.s32.totalorder %s94, %s95
      %p104 = scmp.eq.s32.totalorder %s23, 0
      %p105 = por %p103, %p104
      %p106 = scmp.ne.s32.totalorder %s94, %s95
      %p107 = scmp.eq.s32.totalorder %s24, 1
      %p108 = por %p106, %p107
      %p110 = scmp.ne.s32.totalorder %s95, %s109
      %p111 = scmp.eq.s32.totalorder %s24, 0
      %p112 = por %p110, %p111
      %s114 = sadd.s32 %s113, 1
      %p117 = scmp.eq.s32.totalorder %s18, 1
      %p118 = scmp.ne.s32.totalorder %s113, %s115
      %p119 = scmp.eq.s32.totalorder %s18, 0
      %p120 = por %p118, %p119
      %p121 = scmp.ne.s32.totalorder %s113, %s115
      %p122 = scmp.eq.s32.totalorder %s23, 1
      %p123 = por %p121, %p122
      %p124 = scmp.ne.s32.totalorder %s115, %s116
      %p125 = scmp.eq.s32.totalorder %s23, 0
      %p126 = por %p124, %p125
      %p127 = scmp.ne.s32.totalorder %s115, %s116
      %p128 = scmp.eq.s32.totalorder %s24, 1
      %p129 = por %p127, %p128
      %p131 = scmp.ne.s32.totalorder %s116, %s130
      %p132 = scmp.eq.s32.totalorder %s24, 0
      %p133 = por %p131, %p132
      %s135 = sadd.s32 %s134, 1
      %p138 = scmp.eq.s32.totalorder %s18, 1
      %p139 = scmp.ne.s32.totalorder %s134, %s136
      %p140 = scmp.eq.s32.totalorder %s18, 0
      %p141 = por %p139, %p140
      %p142 = scmp.ne.s32.totalorder %s134, %s136
      %p143 = scmp.eq.s32.totalorder %s23, 1
      %p144 = por %p142, %p143
      %p145 = scmp.ne.s32.totalorder %s136, %s137
      %p146 = scmp.eq.s32.totalorder %s23, 0
      %p147 = por %p145, %p146
      %p148 = scmp.ne.s32.totalorder %s136, %s137
      %p149 = scmp.eq.s32.totalorder %s24, 1
      %p150 = por %p148, %p149
      %p152 = scmp.ne.s32.totalorder %s137, %s151
      %p153 = scmp.eq.s32.totalorder %s24, 0
      %p154 = por %p152, %p153
      %s155 = ssub.s32 %s25, %s37
      %s156 = ssub.s32 %s26, %s33
      %s157 = sor.u32 %s155, %s156
      %p158 = scmp.eq.s32.totalorder %s157, 0
      %s160 = sadd.s32 %s159, 1
      %s161 = scalar_select %p158, %s159, %s160
      %p164 = pneg %p158
      %p165 = scmp.eq.s32.totalorder %s18, 1
      %p166 = por %p164, %p165
      %p167 = scmp.ne.s32.totalorder %s159, %s162
      %p168 = scmp.eq.s32.totalorder %s18, 0
      %p169 = por %p167, %p168
      %p170 = scmp.ne.s32.totalorder %s159, %s162
      %p171 = scmp.eq.s32.totalorder %s23, 1
      %p172 = por %p170, %p171
      %p173 = scmp.ne.s32.totalorder %s162, %s163
      %p174 = scmp.eq.s32.totalorder %s23, 0
      %p175 = por %p173, %p174
      %p176 = scmp.ne.s32.totalorder %s162, %s163
      %p177 = scmp.eq.s32.totalorder %s24, 1
      %p178 = por %p176, %p177
      %p180 = scmp.ne.s32.totalorder %s163, %s179
      %p181 = scmp.eq.s32.totalorder %s24, 0
      %p182 = por %p180, %p181
      %p183 = scmp.le.s32.totalorder 1, %s18
      %p184 = scmp.lt.s32.totalorder %s18, 3
      %p185 = pnand %p183, %p184
      %p186 = pneg %p185
      // Predicated region
      $region9: #{tpu_custom_call.1} parent=5 // pred_check
        _
      $region10: #{tpu_custom_call.1} parent=5 // pred_check_branch
        %188 = sbr.rel (%p185) target = $region12
      $region11: #{tpu_custom_call.1} parent=5 // pred_region
        %s189 = ssub.s32 %s18, 1
        // Predicated region
        $region13: #{tpu_custom_call.1} parent=11 // pred_check
          %p190 = pneg %p84
        $region14: #{tpu_custom_call.1} parent=11 // pred_check_branch
          %192 = sbr.rel (%p190) target = $region16
        $region15: #{tpu_custom_call.1} parent=11 // pred_region
          %194 = vsyncadd [#allocation6], 0
          %s195 = smul.addr %s28, 8
          %s196 = scalar_lea.hbm %s1, %s195
          %s198 = sshll.u32 %s196, 4
          %s199 = int_to_ptr.hbm [resolvable:$true] %s198
          %s200 = sshll.u32 [#allocation5], 4
          %s201 = int_to_ptr.vmem [resolvable:$true] %s200
          %203 = dma.hbm_to_vmem [thread:$0]  %s199, 128, %s201, [#allocation6]
        $region16: #{tpu_custom_call.1} parent=11 // pred_fallthru
          _
        // Predicated region
        $region17: #{tpu_custom_call.1} parent=11 // pred_check
          %p204 = pneg %p105
        $region18: #{tpu_custom_call.1} parent=11 // pred_check_branch
          %206 = sbr.rel (%p204) target = $region20
        $region19: #{tpu_custom_call.1} parent=11 // pred_region
          _
        $region20: #{tpu_custom_call.1} parent=11 // pred_fallthru
          _
        // Predicated region
        $region21: #{tpu_custom_call.1} parent=11 // pred_check
          %p207 = pneg %p126
        $region22: #{tpu_custom_call.1} parent=11 // pred_check_branch
          %209 = sbr.rel (%p207) target = $region24
        $region23: #{tpu_custom_call.1} parent=11 // pred_region
          _
        $region24: #{tpu_custom_call.1} parent=11 // pred_fallthru
          _
        // Predicated region
        $region25: #{tpu_custom_call.1} parent=11 // pred_check
          %p210 = pneg %p147
        $region26: #{tpu_custom_call.1} parent=11 // pred_check_branch
          %212 = sbr.rel (%p210) target = $region28
        $region27: #{tpu_custom_call.1} parent=11 // pred_region
          _
        $region28: #{tpu_custom_call.1} parent=11 // pred_fallthru
          _
      $region12: #{tpu_custom_call.1} parent=5 // pred_fallthru
        _
      %p213 = scmp.lt.s32.totalorder %s18, 2
      // Predicated region
      $region29: #{tpu_custom_call.1} parent=5 // pred_check
        %p214 = pneg %p213
      $region30: #{tpu_custom_call.1} parent=5 // pred_check_branch
        %216 = sbr.rel (%p214) target = $region32
      $region31: #{tpu_custom_call.1} parent=5 // pred_region
        // Predicated region
        $region33: #{tpu_custom_call.1} parent=31 // pred_check
          %p217 = pneg %p52
        $region34: #{tpu_custom_call.1} parent=31 // pred_check_branch
          %219 = sbr.rel (%p217) target = $region36
        $region35: #{tpu_custom_call.1} parent=31 // pred_region
          %s220 = sand.u32 %s42, 1
          %s221 = scalar_lea.sflag [#allocation3], %s220
          %s222 = sand.u32 %s42, 1
          %s223 = smul.addr %s222, 8
          %s224 = scalar_lea.vmem [#allocation2], %s223
          %226 = vsyncadd %s221, 0
          %s227 = sadd.s32 %s26, %s25
          %s228 = smul.addr %s227, 8
          %s229 = scalar_lea.hbm %s0, %s228
          %s231 = sshll.u32 %s229, 4
          %s232 = int_to_ptr.hbm [resolvable:$true] %s231
          %s233 = sshll.u32 %s224, 4
          %s234 = int_to_ptr.vmem [resolvable:$true] %s233
          %236 = dma.hbm_to_vmem [thread:$0]  %s232, 128, %s234, %s221
        $region36: #{tpu_custom_call.1} parent=31 // pred_fallthru
          _
      $region32: #{tpu_custom_call.1} parent=5 // pred_fallthru
        _
      %p237 = scmp.le.s32.totalorder 1, %s18
      %p238 = scmp.lt.s32.totalorder %s18, 3
      %p239 = pnand %p237, %p238
      %p240 = pneg %p239
      // Predicated region
      $region37: #{tpu_custom_call.1} parent=5 // pred_check
        _
      $region38: #{tpu_custom_call.1} parent=5 // pred_check_branch
        %242 = sbr.rel (%p239) target = $region40
      $region39: #{tpu_custom_call.1} parent=5 // pred_region
        %s243 = ssub.s32 %s18, 1
        %s244 = sand.u32 %s45, 1
        %s245 = scalar_lea.sflag [#allocation3], %s244
        %s246 = sand.u32 %s45, 1
        %s247 = smul.addr %s246, 8
        %s248 = scalar_lea.vmem [#allocation2], %s247
        // Predicated region
        $region41: #{tpu_custom_call.1} parent=39 // pred_check
          %p249 = pneg %p58
        $region42: #{tpu_custom_call.1} parent=39 // pred_check_branch
          %251 = sbr.rel (%p249) target = $region44
        $region43: #{tpu_custom_call.1} parent=39 // pred_region
          %253 = dma.done %s245, 128
        $region44: #{tpu_custom_call.1} parent=39 // pred_fallthru
          _
        // Predicated region
        $region45: #{tpu_custom_call.1} parent=39 // pred_check
          %p254 = pneg %p84
        $region46: #{tpu_custom_call.1} parent=39 // pred_check_branch
          %256 = sbr.rel (%p254) target = $region48
        $region47: #{tpu_custom_call.1} parent=39 // pred_region
          %258 = dma.done [#allocation6], 128
        $region48: #{tpu_custom_call.1} parent=39 // pred_fallthru
          _
        %s259 = sand.u32 %s45, 1
        %s260 = scalar_lea.sflag [#allocation3], %s259
        %s261 = sand.u32 %s45, 1
        %s262 = smul.addr %s261, 8
        %s263 = scalar_lea.vmem [#allocation2], %s262
        %p264 = pneg %p58
        %p265 = pneg %p55
        %p266 = pneg %p84
        %p267 = pneg %p81
        %p268 = pneg %p105
        %p269 = pneg %p102
        %p270 = pneg %p126
        %p271 = pneg %p123
        %p272 = pneg %p147
        %p273 = pneg %p144
        %p274 = pneg %p175
        %p275 = pneg %p172
        %s276 = sand.u32 %s162, 1
        %s277 = scalar_lea.sflag [#allocation4], %s276
        %s278 = sand.u32 %s162, 1
        %s279 = smul.addr %s278, 4
        %s280 = scalar_lea.vmem [#allocation7], %s279
        %v281 = vld [vmem:[%s248] sm:$0xff]
        %v282 = vld [vmem:[#allocation5] sm:$0xff]
        %v283 = vadd.f32 %v281, %v282
        %v284 = vld [vmem:[%s2] sm:$0x1]
        %v286 = vperm.slane %v284, 0
        %v288 = vadd.f32 %v283, %v286
        %vm289 = vcmask 261120
        %v290 = vsel %vm289, %v288, 0.0
        %291 = vadd.xlane.f32.xlu0 %v290
        %v292 = vpop.xlane.xlu0 %291
        %v293 = vrcp.pop 32.0
        %v294 = vmul.f32 32.0, %v293
        %v295 = vsub.f32 1.0, %v294
        %v296 = vmul.f32 %v293, %v295
        %v297 = vadd.f32 %v293, %v296
        %vm298 = vweird.f32 %v293
        %v299 = vsel %vm298, %v293, %v297
        %v300 = vmul.f32 %v292, %v299
        %v301 = vsub.f32 %v288, %v300
        %v302 = vmul.f32 %v301, %v301
        %v303 = vsel %vm289, %v302, 0.0
        %304 = vadd.xlane.f32.xlu0 %v303
        %v305 = vpop.xlane.xlu0 %304
        %v306 = vmul.f32 %v305, %v299
        %v307 = vadd.f32 %v306, 1e-12
        %v308 = vrsqrt.pop %v307
        %v309 = vmul.f32 %v308, %v307
        %v310 = vmul.f32 %v309, %v308
        %v311 = vmul.f32 0.5, %v310
        %v312 = vsub.f32 1.5, %v311
        %v313 = vmul.f32 %v308, %v312
        %vm314 = vweird.f32 %v307
        %vm315 = vweird.f32 %v308
        %vm316 = vmor %vm314, %vm315
        %v317 = vsel %vm316, %v308, %v313
        %v318 = vmul.f32 %v301, %v317
        %v319 = vld [vmem:[%s3] sm:$0x1]
        %v321 = vperm.slane %v319, 0
        %v323 = vmul.f32 %v318, %v321
        %v324 = vld [vmem:[%s4] sm:$0x1]
        %v326 = vperm.slane %v324, 0
        %v328 = vadd.f32 %v323, %v326
        %v329 = vpack.c.bf16 %v328, %v328
        %vm330 = vcmask 257024
        %331 = vst.msk [vmem:[%s280] sm:$0xf] %vm330, %v329
        %s332 = sand.u32 %s162, 1
        %s333 = scalar_lea.sflag [#allocation4], %s332
        %s334 = sand.u32 %s162, 1
        %s335 = smul.addr %s334, 4
        %s336 = scalar_lea.vmem [#allocation7], %s335
        // Predicated region
        $region49: #{tpu_custom_call.1} parent=39 // pred_check
          %p337 = pneg %p172
        $region50: #{tpu_custom_call.1} parent=39 // pred_check_branch
          %339 = sbr.rel (%p337) target = $region52
        $region51: #{tpu_custom_call.1} parent=39 // pred_region
          %341 = vsyncadd %s333, 0
          %s342 = sadd.s32 %s28, %s27
          %s343 = smul.addr %s342, 4
          %s344 = scalar_lea.hbm %s5, %s343
          %s346 = sshll.u32 %s336, 4
          %s347 = int_to_ptr.vmem [resolvable:$true] %s346
          %s348 = sshll.u32 %s344, 4
          %s349 = int_to_ptr.hbm [resolvable:$true] %s348
          %351 = dma.vmem_to_hbm [thread:$0]  %s347, 64, %s349, %s333
        $region52: #{tpu_custom_call.1} parent=39 // pred_fallthru
          _
      $region40: #{tpu_custom_call.1} parent=5 // pred_fallthru
        _
      %p352 = scmp.le.s32.totalorder 2, %s18
      // Predicated region
      $region53: #{tpu_custom_call.1} parent=5 // pred_check
        %p353 = pneg %p352
      $region54: #{tpu_custom_call.1} parent=5 // pred_check_branch
        %355 = sbr.rel (%p353) target = $region56
      $region55: #{tpu_custom_call.1} parent=5 // pred_region
        %s356 = ssub.s32 %s18, 2
        // Predicated region
        $region57: #{tpu_custom_call.1} parent=55 // pred_check
          %p357 = pneg %p178
        $region58: #{tpu_custom_call.1} parent=55 // pred_check_branch
          %359 = sbr.rel (%p357) target = $region60
        $region59: #{tpu_custom_call.1} parent=55 // pred_region
          %s360 = sand.u32 %s163, 1
          %s361 = scalar_lea.sflag [#allocation4], %s360
          %s362 = sand.u32 %s163, 1
          %s363 = smul.addr %s362, 4
          %s364 = scalar_lea.vmem [#allocation7], %s363
          %366 = dma.done %s361, 64
        $region60: #{tpu_custom_call.1} parent=55 // pred_fallthru
          _
      $region56: #{tpu_custom_call.1} parent=5 // pred_fallthru
        _
    $region6: #{tpu_custom_call.1} parent=1 // loop_footer
      %s22 = sadd.s32 1, %s18
    $region7: #{tpu_custom_call.1} parent=1 // loop_footer_branch
      %17 = sbr.rel target = $region3
    $region8: #{tpu_custom_call.1} parent=1 // loop_exit
      _
    %367 = vsyncpa [#allocation3], 1
    %s368 = scalar_lea.sflag [#allocation3], 1
    %369 = vsyncpa %s368, 1
    %370 = vsyncpa [#allocation6], 1
    %371 = vsyncpa [#allocation4], 1
    %s372 = scalar_lea.sflag [#allocation4], 1
    %373 = vsyncpa %s372, 1

</llo_original>
